<compile_context>
chip_gen: v7x
topology: tpu7x:2x2x1
jax: 0.10.0
libtpu: 0.0.40
codegen_flags: <defaults>
</compile_context>

<pallas_src>
import functools

import jax
import jax.numpy as jnp
from jax.experimental import pallas as pl
from jax.experimental.pallas import tpu as pltpu


# ----------------------------------------------------------------------------
# Kernels
# ----------------------------------------------------------------------------
def _packed_kernel(len_ref, tab_ref, out_ref):
    """Packed path (2E == 64): two chunk rows per 128-lane output row.

    len_ref : [bn2, 2]  int32   lengths of chunks (2r, 2r+1)
    tab_ref : [4, 128]  f32     rows = [dist_b | genre | dist_b | genre]
    out_ref : [bn2, 128] f32    lanes [0,64)=chunk 2r features, [64,128)=chunk 2r+1
    """
    bn2 = len_ref.shape[0]
    lens = len_ref[...]                                            # [bn2, 2]

    lane = jax.lax.broadcasted_iota(jnp.int32, (bn2, 128), 1)      # [bn2, 128]
    lane_len = jnp.where(lane < 64, lens[:, 0:1], lens[:, 1:2])    # per-lane length

    r0 = tab_ref[0:1, :]
    r1 = tab_ref[1:2, :]
    r2 = tab_ref[2:3, :]
    r3 = tab_ref[3:4, :]

    # bucket = min(floor(log2(len)), 3) for len >= 1, via 3-select binary tree.
    hi = jnp.where(lane_len >= 8, r3, r2)
    lo = jnp.where(lane_len >= 2, r1, r0)
    out_ref[...] = jnp.where(lane_len >= 4, hi, lo)


def _generic_kernel(len_ref, tab_ref, out_ref):
    """Fallback path (any E): fused [4, 2E] table, single full-tile store.

    len_ref : [bn, 1]   int32
    tab_ref : [4, 2E]   f32
    out_ref : [bn, 2E]  f32
    """
    lens = len_ref[...]                                            # [bn, 1]
    r0 = tab_ref[0:1, :]
    r1 = tab_ref[1:2, :]
    r2 = tab_ref[2:3, :]
    r3 = tab_ref[3:4, :]
    hi = jnp.where(lens >= 8, r3, r2)
    lo = jnp.where(lens >= 2, r1, r0)
    out_ref[...] = jnp.where(lens >= 4, hi, lo)


# ----------------------------------------------------------------------------
# Wrapper
# ----------------------------------------------------------------------------
def _round_up(x, m):
    return ((x + m - 1) // m) * m


def _forward_packed(lengths, combined, block_n):
    """2E == 64: emit a bit-identical [ceil(N/2), 128] lane-dense output."""
    n = lengths.shape[0]
    feat = combined.shape[1]                      # 64
    tab128 = jnp.concatenate([combined, combined], axis=1)          # [4, 128]

    n2 = -(-n // 2)                               # packed rows (2 chunks each)
    if n2 * 2 != n:                               # odd N: pad one length (bucket 0)
        lengths = jnp.pad(lengths, (0, 1), constant_values=1)
    lens2 = lengths.reshape(n2, 2)

    if n2 <= 8:
        bn2 = n2                                  # single full block, no padding
    else:
        cap2 = max(8, (block_n // 2) // 8 * 8)
        bn2 = min(cap2, _round_up(-(-n2 // 2), 8))   # >= 2 grid steps (v7x megacore)

    n2_pad = _round_up(n2, bn2)
    if n2_pad != n2:
        lens2 = jnp.pad(lens2, ((0, n2_pad - n2), (0, 0)), constant_values=1)

    out = pl.pallas_call(
        _packed_kernel,
        out_shape=jax.ShapeDtypeStruct((n2_pad, 128), jnp.float32),
        grid=(n2_pad // bn2,),
        in_specs=[
            pl.BlockSpec((bn2, 2), lambda i: (i, 0)),       # packed lengths
            pl.BlockSpec((4, 128), lambda i: (0, 0)),        # fused+doubled table
        ],
        out_specs=pl.BlockSpec((bn2, 128), lambda i: (i, 0)),
        compiler_params=pltpu.CompilerParams(
            dimension_semantics=("parallel",)),
    )(lens2, tab128)

    out = out.reshape(n2_pad * 2, feat)           # contiguous -> metadata-only bitcast
    if n2_pad * 2 != n:
        out = out[:n]
    return out


def _forward_generic(lengths, combined, block_n):
    """Any E: single full-tile store of the fused [4, 2E] selection."""
    n = lengths.shape[0]
    feat = combined.shape[1]
    lens = lengths.reshape(n, 1)

    if n <= 8:
        bn = n
    else:
        cap = max(8, block_n // 8 * 8)
        bn = min(cap, _round_up(-(-n // 2), 8))

    n_pad = _round_up(n, bn)
    if n_pad != n:
        lens = jnp.pad(lens, ((0, n_pad - n), (0, 0)), constant_values=1)

    out = pl.pallas_call(
        _generic_kernel,
        out_shape=jax.ShapeDtypeStruct((n_pad, feat), jnp.float32),
        grid=(n_pad // bn,),
        in_specs=[
            pl.BlockSpec((bn, 1), lambda i: (i, 0)),
            pl.BlockSpec((4, feat), lambda i: (0, 0)),
        ],
        out_specs=pl.BlockSpec((bn, feat), lambda i: (i, 0)),
        compiler_params=pltpu.CompilerParams(
            dimension_semantics=("parallel",)),
    )(lens, combined)

    return out[:n] if n_pad != n else out


@functools.partial(jax.jit, static_argnames=("block_n",))
def chunk_encoder_forward(lengths, genre_id, dist_table, genre_table, block_n=4096):
    """lengths: [N] (or [N,1]) int; genre_id: scalar/[1] int;
    dist_table: [4, E] f32; genre_table: [7, E] f32.

    Returns [N, 2E] f32 with distance in [:, :E] and genre in [:, E:]
    (eval-mode dropout == identity).
    """
    lengths = lengths.reshape(-1).astype(jnp.int32)
    emb = dist_table.shape[1]
    assert dist_table.shape[0] == 4, "ChunkEncoder uses a 4-bucket distance table"

    # One-time XLA gather of the genre row, fused with the distance table into
    # a single [4, 2E] table: row b = [dist_b | genre_row].
    genre_row = genre_table[jnp.asarray(genre_id, jnp.int32).reshape(())]
    combined = jnp.concatenate(
        [dist_table, jnp.broadcast_to(genre_row, (4, emb))], axis=1)  # [4, 2E]

    if 2 * emb == 64:
        return _forward_packed(lengths, combined, block_n)
    # TODO(synk): extend lane-packing to other E with 128 % (2E) == 0.
    return _forward_generic(lengths, combined, block_n)


# ----------------------------------------------------------------------------
# Pure-JAX reference (mirrors the PyTorch forward in eval mode)
# ----------------------------------------------------------------------------
def reference_forward(lengths, genre_id, dist_table, genre_table):
    lens = lengths.reshape(-1).astype(jnp.int32)
    bucket = ((lens >= 2).astype(jnp.int32)
              + (lens >= 4).astype(jnp.int32)
              + (lens >= 8).astype(jnp.int32))          # == min(floor(log2(l)),3), l>=1
    distance = dist_table[bucket]
    genre = jnp.broadcast_to(genre_table[jnp.asarray(genre_id).reshape(())],
                             (lens.shape[0], genre_table.shape[1]))
    return jnp.concatenate([distance, genre], axis=1)


if __name__ == "__main__":
    EMB_SIZE = 32

    key = jax.random.PRNGKey(0)
    k_dist, k_genre, k_len, k_dist2, k_genre2 = jax.random.split(key, 5)

    # Deterministic "Embedding" weights (torch default init ~ N(0,1)).
    distance_emb = jax.random.normal(k_dist, (4, EMB_SIZE), dtype=jnp.float32)
    genre_emb = jax.random.normal(k_genre, (7, EMB_SIZE), dtype=jnp.float32)

    genre2int = {g: gi for gi, g in
                 enumerate(["bc", "bn", "mz", "nw", "pt", "tc", "wb"])}
    document_id = "nw_some_doc"                      # doc['document_id'][:2] -> 'nw'
    genre_id = jnp.array([genre2int[document_id[:2]]], dtype=jnp.int32)

    # --- Test 1: tiny N (packed path, whole array in one grid step, no pad) ---
    N1 = 8
    chunks_length = jnp.array([1, 2, 3, 5, 8, 13, 21, 100], dtype=jnp.int32)
    out1 = jax.block_until_ready(
        chunk_encoder_forward(chunks_length, genre_id, distance_emb, genre_emb))
    ref1 = reference_forward(chunks_length, genre_id, distance_emb, genre_emb)
    assert out1.shape == (N1, 2 * EMB_SIZE), out1.shape
    assert jnp.allclose(out1, ref1, atol=1e-6, rtol=1e-6), "mismatch (N=8)"

    # --- Test 2: larger N, packed path, multi-step parallel grid + pad/slice ---
    N2 = 300
    lens2 = jax.random.randint(k_len, (N2,), 1, 200, dtype=jnp.int32)
    out2 = jax.block_until_ready(
        chunk_encoder_forward(lens2, genre_id, distance_emb, genre_emb, block_n=128))
    ref2 = reference_forward(lens2, genre_id, distance_emb, genre_emb)
    assert out2.shape == (N2, 2 * EMB_SIZE), out2.shape
    assert jnp.allclose(out2, ref2, atol=1e-6, rtol=1e-6), "mismatch (N=300)"

    # --- Test 3: generic fallback path (E=64 -> feat=128, already lane-dense) ---
    EMB2 = 64
    dist2 = jax.random.normal(k_dist2, (4, EMB2), dtype=jnp.float32)
    genre2 = jax.random.normal(k_genre2, (7, EMB2), dtype=jnp.float32)
    N3 = 37
    lens3 = jax.random.randint(k_len, (N3,), 1, 500, dtype=jnp.int32)
    out3 = jax.block_until_ready(
        chunk_encoder_forward(lens3, genre_id, dist2, genre2, block_n=64))
    ref3 = reference_forward(lens3, genre_id, dist2, genre2)
    assert out3.shape == (N3, 2 * EMB2), out3.shape
    assert jnp.allclose(out3, ref3, atol=1e-6, rtol=1e-6), "mismatch (generic path)"

    print("KERNEL_OK")
</pallas_src>

<mosaic_0001>
module attributes {stable_mosaic.version = 11 : i64} {
  func.func @_packed_kernel(%arg0: i32, %arg1: memref<4x2xi32, #tpu.memory_space<vmem>>, %arg2: memref<4x128xf32, #tpu.memory_space<vmem>>, %arg3: memref<4x128xf32, #tpu.memory_space<vmem>>) attributes {dimension_semantics = [#tpu.dimension_semantics<parallel>], iteration_bounds = array<i64: 1>, scalar_prefetch = 0 : i64, scratch_operands = 0 : i64, tpu.core_type = #tpu.core_type<tc>, window_params = [{transform_indices = @transform_0, window_bounds = array<i64: 4, 2>}, {pipeline_mode = #tpu.pipeline_mode<synchronous>, transform_indices = @transform_1, window_bounds = array<i64: 4, 128>}, {transform_indices = @transform_2, window_bounds = array<i64: 4, 128>}]} {
    %c0 = arith.constant 0 : index
    %c0_0 = arith.constant 0 : index
    %0 = vector.load %arg1[%c0, %c0_0] : memref<4x2xi32, #tpu.memory_space<vmem>>, vector<4x2xi32>
    %1 = tpu.iota {dimensions = array<i32: 1>} : vector<4x128xi32>
    %c64_i32 = arith.constant 64 : i32
    %2 = vector.broadcast %c64_i32 : i32 to vector<4x128xi32>
    %3 = arith.cmpi slt, %1, %2 : vector<4x128xi32>
    %4 = vector.extract_strided_slice %0 {offsets = [0, 0], sizes = [4, 1], strides = [1, 1]} : vector<4x2xi32> to vector<4x1xi32>
    %5 = vector.extract_strided_slice %0 {offsets = [0, 1], sizes = [4, 1], strides = [1, 1]} : vector<4x2xi32> to vector<4x1xi32>
    %6 = vector.shape_cast %4 : vector<4x1xi32> to vector<4x1xi32>
    %7 = vector.broadcast %6 : vector<4x1xi32> to vector<4x128xi32>
    %8 = vector.shape_cast %5 : vector<4x1xi32> to vector<4x1xi32>
    %9 = vector.broadcast %8 : vector<4x1xi32> to vector<4x128xi32>
    %10 = arith.select %3, %7, %9 : vector<4x128xi1>, vector<4x128xi32>
    %c0_1 = arith.constant 0 : index
    %c0_2 = arith.constant 0 : index
    %11 = vector.load %arg2[%c0_1, %c0_2] : memref<4x128xf32, #tpu.memory_space<vmem>>, vector<1x128xf32>
    %c1 = arith.constant 1 : index
    %c0_3 = arith.constant 0 : index
    %12 = vector.load %arg2[%c1, %c0_3] : memref<4x128xf32, #tpu.memory_space<vmem>>, vector<1x128xf32>
    %c2 = arith.constant 2 : index
    %c0_4 = arith.constant 0 : index
    %13 = vector.load %arg2[%c2, %c0_4] : memref<4x128xf32, #tpu.memory_space<vmem>>, vector<1x128xf32>
    %c3 = arith.constant 3 : index
    %c0_5 = arith.constant 0 : index
    %14 = vector.load %arg2[%c3, %c0_5] : memref<4x128xf32, #tpu.memory_space<vmem>>, vector<1x128xf32>
    %c8_i32 = arith.constant 8 : i32
    %15 = vector.broadcast %c8_i32 : i32 to vector<4x128xi32>
    %16 = arith.cmpi sge, %10, %15 : vector<4x128xi32>
    %17 = vector.shape_cast %14 : vector<1x128xf32> to vector<1x128xf32>
    %18 = vector.broadcast %17 : vector<1x128xf32> to vector<4x128xf32>
    %19 = vector.shape_cast %13 : vector<1x128xf32> to vector<1x128xf32>
    %20 = vector.broadcast %19 : vector<1x128xf32> to vector<4x128xf32>
    %21 = arith.select %16, %18, %20 : vector<4x128xi1>, vector<4x128xf32>
    %c2_i32 = arith.constant 2 : i32
    %22 = vector.broadcast %c2_i32 : i32 to vector<4x128xi32>
    %23 = arith.cmpi sge, %10, %22 : vector<4x128xi32>
    %24 = vector.shape_cast %12 : vector<1x128xf32> to vector<1x128xf32>
    %25 = vector.broadcast %24 : vector<1x128xf32> to vector<4x128xf32>
    %26 = vector.shape_cast %11 : vector<1x128xf32> to vector<1x128xf32>
    %27 = vector.broadcast %26 : vector<1x128xf32> to vector<4x128xf32>
    %28 = arith.select %23, %25, %27 : vector<4x128xi1>, vector<4x128xf32>
    %c4_i32 = arith.constant 4 : i32
    %29 = vector.broadcast %c4_i32 : i32 to vector<4x128xi32>
    %30 = arith.cmpi sge, %10, %29 : vector<4x128xi32>
    %31 = arith.select %30, %21, %28 : vector<4x128xi1>, vector<4x128xf32>
    %c0_6 = arith.constant 0 : index
    %c0_7 = arith.constant 0 : index
    %32 = vector.load %arg3[%c0_6, %c0_7] : memref<4x128xf32, #tpu.memory_space<vmem>>, vector<4x128xf32>
    tpu.vector_store %arg3[%c0_6, %c0_7], %31 {strides = array<i32>} : memref<4x128xf32, #tpu.memory_space<vmem>>, vector<4x128xf32>,
    return
  }
  func.func @transform_0(%arg0: i32) -> (i32, i32) {
    %c0_i32 = arith.constant 0 : i32
    %c0_i32_0 = arith.constant 0 : i32
    return %arg0, %c0_i32 : i32, i32
  }
  func.func @transform_1(%arg0: i32) -> (i32, i32) {
    %c0_i32 = arith.constant 0 : i32
    %c0_i32_0 = arith.constant 0 : i32
    %c0_i32_1 = arith.constant 0 : i32
    return %c0_i32, %c0_i32_0 : i32, i32
  }
  func.func @transform_2(%arg0: i32) -> (i32, i32) {
    %c0_i32 = arith.constant 0 : i32
    %c0_i32_0 = arith.constant 0 : i32
    return %arg0, %c0_i32 : i32, i32
  }
}

</mosaic_0001>

<llo_original>
// kernel: chunk_encoder_forward.1
$region0: #{chunk_encoder_forward.1}
  #allocation0 [shape = 'u32[]', space=smem, size = 0x4, offset = 0x4, fixed_abs, tag = 'smem constant byte address 0x4 - core index']
  #allocation1 [shape = 'u32[144,128]{1,0:T(1,128)}', space=vmem, size = 0x12000, scoped, tag = 'internal scratch']
  %s0 = inlined_call_operand.vmem [shape: s32[4,2], index: 0, kind: input, shape index: {}]
  %s1 = inlined_call_operand.vmem [shape: f32[4,128], index: 1, kind: input, shape index: {}]
  %s2 = inlined_call_operand.vmem [shape: f32[4,128], index: 2, kind: output, shape index: {}]
  %s3 = sld [smem:[#allocation0]]
  $region18: #{chunk_encoder_forward.1} parent=0
    _
  %s5 = ssub.s32 1, %s3
  %s6 = scalar_select 0, %s5, %s3
  // Predicated region
  $region2: #{chunk_encoder_forward.1} parent=0 // pred_check
    _
  $region3: #{chunk_encoder_forward.1} parent=0 // pred_check_branch
    %8 = sbr.rel (0) target = $region5
  $region4: #{chunk_encoder_forward.1} parent=0 // pred_region
    _
  $region5: #{chunk_encoder_forward.1} parent=0 // pred_fallthru
    _
  // Predicated region
  $region6: #{chunk_encoder_forward.1} parent=0 // pred_check
    _
  $region7: #{chunk_encoder_forward.1} parent=0 // pred_check_branch
    %10 = sbr.rel (0) target = $region9
  $region8: #{chunk_encoder_forward.1} parent=0 // pred_region
    _
  $region9: #{chunk_encoder_forward.1} parent=0 // pred_fallthru
    _
  %v11 = vld [vmem:[%s0] sm:$0xf]
  %v12 = vlaneseq
  %v13 = vand.u32 %v12, 127
  %vm14 = vcmp.lt.s32.totalorder %v13, 64
  %15 = vset.pattern.permute.xlu0 0
  %16 = vperm.xlu0 %15, %v11
  %v17 = vpop.permute.xlu0 %16
  %18 = vset.pattern.permute.xlu0 1
  %19 = vperm.xlu0 %18, %v11
  %v20 = vpop.permute.xlu0 %19
  %v21 = vsel %vm14, %v17, %v20
  %v22 = vld [vmem:[%s1] sm:$0x1]
  %v23 = vld [vmem:[%s1 + $0x1] sm:$0x1]
  %v24 = vld [vmem:[%s1 + $0x2] sm:$0x1]
  %v25 = vld [vmem:[%s1 + $0x3] sm:$0x1]
  %vm26 = vcmp.ge.s32.totalorder %v21, 8
  %v27 = vlaneseq
  %v28 = vshrl.u32 %v27, 7
  %v29 = vsub.s32 0, %v28
  %v30 = vrot.slane %v25, %v29
  %v31 = vlaneseq
  %v32 = vshrl.u32 %v31, 7
  %v33 = vsub.s32 0, %v32
  %v34 = vrot.slane %v24, %v33
  %v35 = vsel %vm26, %v30, %v34
  %vm36 = vcmp.ge.s32.totalorder %v21, 2
  %v37 = vlaneseq
  %v38 = vshrl.u32 %v37, 7
  %v39 = vsub.s32 0, %v38
  %v40 = vrot.slane %v23, %v39
  %v41 = vlaneseq
  %v42 = vshrl.u32 %v41, 7
  %v43 = vsub.s32 0, %v42
  %v44 = vrot.slane %v22, %v43
  %v45 = vsel %vm36, %v40, %v44
  %vm46 = vcmp.ge.s32.totalorder %v21, 4
  %v47 = vsel %vm46, %v35, %v45
  %48 = vst [vmem:[%s2] sm:$0xf] %v47
  // Predicated region
  $region10: #{chunk_encoder_forward.1} parent=0 // pred_check
    _
  $region11: #{chunk_encoder_forward.1} parent=0 // pred_check_branch
    %50 = sbr.rel (0) target = $region13
  $region12: #{chunk_encoder_forward.1} parent=0 // pred_region
    _
  $region13: #{chunk_encoder_forward.1} parent=0 // pred_fallthru
    _
  // Predicated region
  $region14: #{chunk_encoder_forward.1} parent=0 // pred_check
    _
  $region15: #{chunk_encoder_forward.1} parent=0 // pred_check_branch
    %52 = sbr.rel (0) target = $region17
  $region16: #{chunk_encoder_forward.1} parent=0 // pred_region
    _
  $region17: #{chunk_encoder_forward.1} parent=0 // pred_fallthru
    _

</llo_original>
